<compile_context>
chip_gen: v7x
topology: tpu7x:2x2x1
jax: 0.10.0
libtpu: 0.0.40
codegen_flags: <defaults>
</compile_context>

<pallas_src>
import math

import jax
import jax.numpy as jnp
from jax.experimental import pallas as pl
from jax.experimental.pallas import tpu as pltpu

# Chunk used when tiling a large minor dim.  1024 is a multiple of both 8
# (sublane) and 128 (lane), so it is a legal block size on whichever side of
# the transpose the dim ends up.
_TILE = 1024
# Only tile once a dim is at least this big — large tiles amortize the
# ~0.35us per-grid-step overhead and stay near the HBM roofline.
_TILE_THRESHOLD = 2 * _TILE


def _normalize_dims(dims, ndim):
    dims = tuple(int(d) % ndim for d in dims)
    if sorted(dims) != list(range(ndim)):
        raise ValueError(f"dims={dims} is not a permutation of range({ndim})")
    return dims


def _coalesce(shape, dims):
    """Drop unit dims and merge input dims that remain adjacent & in-order in
    the output.  Returns (reduced_input_shape, reduced_dims)."""
    keep = [d for d in range(len(shape)) if shape[d] != 1]
    if not keep:
        return (), ()
    rank_of = {d: i for i, d in enumerate(keep)}
    shape_nz = [shape[d] for d in keep]
    dims_nz = [rank_of[d] for d in dims if shape[d] != 1]

    # Runs of consecutive input dims, built while walking the output order.
    groups = []
    for d in dims_nz:
        if groups and groups[-1][-1] + 1 == d:
            groups[-1].append(d)
        else:
            groups.append([d])

    order = sorted(range(len(groups)), key=lambda g: groups[g][0])  # input order
    pos_in_input = {g: i for i, g in enumerate(order)}
    red_in_shape = tuple(
        math.prod(shape_nz[d] for d in groups[g]) for g in order
    )
    red_dims = tuple(pos_in_input[g] for g in range(len(groups)))
    return red_in_shape, red_dims


def pallas_permute(x, dims):
    x = jnp.asarray(x)
    ndim = x.ndim
    dims = _normalize_dims(dims, ndim)
    out_shape = tuple(x.shape[d] for d in dims)

    red_shape, red_dims = _coalesce(x.shape, dims)
    R = len(red_shape)
    if R <= 1:
        # Identity / unit-dim-only permutation: memory layout is unchanged,
        # a reshape is free and avoids any kernel launch.
        return jnp.reshape(x, out_shape)

    xr = jnp.reshape(x, red_shape)  # contiguous row-major => metadata only
    red_out_shape = tuple(red_shape[d] for d in red_dims)
    inv = [0] * R
    for p, d in enumerate(red_dims):
        inv[d] = p

    # Dims that sit in the minor-two positions of either layout must be
    # materialized inside each block (full extent, or tiled by a multiple of
    # 8/128) so both BlockSpecs satisfy the (8,128) trailing-dims rule.
    minor_in = set(range(max(R - 2, 0), R))
    minor_out = set(red_dims[max(R - 2, 0):])
    full_dims = minor_in | minor_out

    # Grid axes:
    #  (a) "outer" dims (leading in both layouts): size-1 blocks, the permute
    #      of these dims is a pure block-index remap done by the index_maps.
    #  (b) large minor dims tiled by _TILE: bounds VMEM and creates parallel
    #      grid steps (v7x shards "parallel" axes across its 2 TensorCores).
    grid_input_dims = [d for d in range(R) if d not in full_dims]
    block = {d: 1 for d in grid_input_dims}
    for d in sorted(full_dims):
        size = red_shape[d]
        if size >= _TILE_THRESHOLD and size % _TILE == 0:
            block[d] = _TILE
            grid_input_dims.append(d)
        else:
            block[d] = size
    axis_of = {d: i for i, d in enumerate(grid_input_dims)}
    grid = tuple(red_shape[d] // block[d] for d in grid_input_dims) or (1,)

    in_block = tuple(block[d] for d in range(R))
    out_block = tuple(block[red_dims[p]] for p in range(R))

    def in_index_map(*g):
        return tuple(g[axis_of[d]] if d in axis_of else 0 for d in range(R))

    def out_index_map(*g):
        return tuple(
            g[axis_of[red_dims[p]]] if red_dims[p] in axis_of else 0
            for p in range(R)
        )

    def kernel(x_ref, o_ref):
        # After coalescing, common permutations (NCHW<->NHWC, swaps of
        # adjacent dim groups, pure 2-D transposes) arrive here as a batched
        # minor-dims transpose, which maps directly onto the XLU.
        # TODO(synk): irreducible rank>=3 permutations (e.g. full reversal
        # (2,1,0)) rely on Mosaic's generic N-D transpose lowering; a
        # multi-pass decomposition into batched 2-D transposes would be more
        # robust for those cases.
        o_ref[...] = jnp.transpose(x_ref[...], red_dims)

    out = pl.pallas_call(
        kernel,
        out_shape=jax.ShapeDtypeStruct(red_out_shape, x.dtype),
        grid=grid,
        in_specs=[pl.BlockSpec(in_block, in_index_map)],
        out_specs=pl.BlockSpec(out_block, out_index_map),
        compiler_params=pltpu.CompilerParams(
            dimension_semantics=("parallel",) * len(grid)
        ),
    )(xr)
    return jnp.reshape(out, out_shape)


class Permute:
    """Pallas equivalent of the PyTorch `Permute(nn.Module)`."""

    def __init__(self, *dims):
        self.dims = dims

    def __call__(self, x):
        return pallas_permute(x, self.dims)


if __name__ == "__main__":
    key = jax.random.PRNGKey(0)
    B, C, H, W = 2, 4, 16, 16
    x = jax.random.normal(key, (B, C, H, W), jnp.float32)

    cases = [
        (0, 2, 3, 1),  # NCHW -> NHWC: batched (C, H*W) minor transpose, grid=(B,)
        (0, 1, 3, 2),  # swap H, W:    batched (H, W) minor transpose, grid=(B*C,)
        (2, 3, 0, 1),  # (H*W, B*C):   single 2-D transpose
        (0, 1, 2, 3),  # identity:     free reshape, no data movement
    ]
    for dims in cases:
        got = jax.block_until_ready(Permute(*dims)(x))
        want = jnp.transpose(x, dims)
        assert got.shape == want.shape, (dims, got.shape, want.shape)
        assert bool(jnp.all(got == want)), f"mismatch for dims={dims}"

    print("KERNEL_OK")
</pallas_src>

<mosaic_0001>
module attributes {stable_mosaic.version = 11 : i64} {
  func.func @kernel(%arg0: i32, %arg1: memref<1x4x256xf32, #tpu.memory_space<vmem>>, %arg2: memref<1x256x4xf32, #tpu.memory_space<vmem>>) attributes {dimension_semantics = [#tpu.dimension_semantics<parallel>], iteration_bounds = array<i64: 2>, scalar_prefetch = 0 : i64, scratch_operands = 0 : i64, tpu.core_type = #tpu.core_type<tc>, window_params = [{transform_indices = @transform_0, window_bounds = array<i64: 1, 4, 256>}, {transform_indices = @transform_1, window_bounds = array<i64: 1, 256, 4>}]} {
    %c0 = arith.constant 0 : index
    %c0_0 = arith.constant 0 : index
    %c0_1 = arith.constant 0 : index
    %0 = vector.load %arg1[%c0, %c0_0, %c0_1] : memref<1x4x256xf32, #tpu.memory_space<vmem>>, vector<1x4x256xf32>
    %1 = tpu.transpose %0, [0, 2, 1] : vector<1x4x256xf32> -> vector<1x256x4xf32>
    %c0_2 = arith.constant 0 : index
    %c0_3 = arith.constant 0 : index
    %c0_4 = arith.constant 0 : index
    %2 = vector.load %arg2[%c0_2, %c0_3, %c0_4] : memref<1x256x4xf32, #tpu.memory_space<vmem>>, vector<1x256x4xf32>
    tpu.vector_store %arg2[%c0_2, %c0_3, %c0_4], %1 {strides = array<i32>} : memref<1x256x4xf32, #tpu.memory_space<vmem>>, vector<1x256x4xf32>,
    return
  }
  func.func @transform_0(%arg0: i32) -> (i32, i32, i32) {
    %c0_i32 = arith.constant 0 : i32
    %c0_i32_0 = arith.constant 0 : i32
    %c0_i32_1 = arith.constant 0 : i32
    return %arg0, %c0_i32, %c0_i32_0 : i32, i32, i32
  }
  func.func @transform_1(%arg0: i32) -> (i32, i32, i32) {
    %c0_i32 = arith.constant 0 : i32
    %c0_i32_0 = arith.constant 0 : i32
    %c0_i32_1 = arith.constant 0 : i32
    return %arg0, %c0_i32, %c0_i32_0 : i32, i32, i32
  }
}

</mosaic_0001>

<llo_original>
// kernel: tpu_custom_call.1
$region0: #{tpu_custom_call.1}
  #allocation0 [shape = 'u32[]', space=smem, size = 0x4, offset = 0x4, fixed_abs, tag = 'smem constant byte address 0x4 - core index']
  #allocation1 [shape = 'u32[144,128]{1,0:T(1,128)}', space=vmem, size = 0x12000, scoped, tag = 'internal scratch']
  %s0 = inlined_call_operand.hbm [shape: f32[2,4,256], index: 0, kind: input, shape index: {}]
  %s1 = inlined_call_operand.vmem [shape: f32[2,256,4], index: 1, kind: output, shape index: {}]
  %s2 = sld [smem:[#allocation0]]
  $region41: #{tpu_custom_call.1} parent=0
    _
  %s4 = ssub.s32 1, %s2
  %s5 = scalar_select 0, %s4, %s2
  $region1: #{tpu_custom_call.1} parent=0
    #allocation2 [shape = 'u8[8192]{0}', space=vmem, size = 0x2000, scoped, tag = 'input window, operand 0']
    #allocation3 [shape = 's32[2]{0}', space=sflag, size = 0x8, scoped, tag = 'scoped memory for tpu_custom_call.1']
    %6 = vsyncpa [#allocation3], 0
    %s7 = scalar_lea.sflag [#allocation3], 1
    %8 = vsyncpa %s7, 0
    loop: start=0, step=1, limit=4
    $region2: #{tpu_custom_call.1} parent=1 // loop_pre_header
      _
    $region3: #{tpu_custom_call.1} parent=1 // loop_header
      %s10 = sphi 0, %s14
      %p11 = scmp.ge.s32.totalorder %s10, 4
      %s20 = sphi 0, %s22
      %s23 = sphi 0, %s20
      %s24 = sphi 0, %s23
      %s40 = sphi 0, %s24
      %s46 = sphi 0, %s48
      %s49 = sphi 0, %s46
      %s50 = sphi 0, %s49
      %s66 = sphi 0, %s50
    $region4: #{tpu_custom_call.1} parent=1 // loop_header_branch
      %13 = sbr.rel (%p11) target = $region8
    $region5: #{tpu_custom_call.1} parent=1 // loop_body
      %s15 = ssub.s32 %s10, 1
      %s16 = ssub.s32 %s10, 2
      %s17 = sadd.s32 %s10, 1
      %s18 = ssub.s32 %s10, %s17
      %p19 = scmp.eq.s32.totalorder %s18, 0
      %s21 = sadd.s32 %s20, 1
      %s22 = scalar_select %p19, %s20, %s21
      %p25 = pneg %p19
      %p26 = scmp.eq.s32.totalorder %s10, 1
      %p27 = por %p25, %p26
      %p28 = scmp.ne.s32.totalorder %s20, %s23
      %p29 = scmp.eq.s32.totalorder %s10, 0
      %p30 = por %p28, %p29
      %p31 = scmp.ne.s32.totalorder %s20, %s23
      %p32 = scmp.eq.s32.totalorder %s15, 1
      %p33 = por %p31, %p32
      %p34 = scmp.ne.s32.totalorder %s23, %s24
      %p35 = scmp.eq.s32.totalorder %s15, 0
      %p36 = por %p34, %p35
      %p37 = scmp.ne.s32.totalorder %s23, %s24
      %p38 = scmp.eq.s32.totalorder %s16, 1
      %p39 = por %p37, %p38
      %p41 = scmp.ne.s32.totalorder %s24, %s40
      %p42 = scmp.eq.s32.totalorder %s16, 0
      %p43 = por %p41, %p42
      %s44 = ssub.s32 %s10, %s17
      %p45 = scmp.eq.s32.totalorder %s44, 0
      %s47 = sadd.s32 %s46, 1
      %s48 = scalar_select %p45, %s46, %s47
      %p51 = pneg %p45
      %p52 = scmp.eq.s32.totalorder %s10, 1
      %p53 = por %p51, %p52
      %p54 = scmp.ne.s32.totalorder %s46, %s49
      %p55 = scmp.eq.s32.totalorder %s10, 0
      %p56 = por %p54, %p55
      %p57 = scmp.ne.s32.totalorder %s46, %s49
      %p58 = scmp.eq.s32.totalorder %s15, 1
      %p59 = por %p57, %p58
      %p60 = scmp.ne.s32.totalorder %s49, %s50
      %p61 = scmp.eq.s32.totalorder %s15, 0
      %p62 = por %p60, %p61
      %p63 = scmp.ne.s32.totalorder %s49, %s50
      %p64 = scmp.eq.s32.totalorder %s16, 1
      %p65 = por %p63, %p64
      %p67 = scmp.ne.s32.totalorder %s50, %s66
      %p68 = scmp.eq.s32.totalorder %s16, 0
      %p69 = por %p67, %p68
      %p70 = scmp.le.s32.totalorder 1, %s10
      %p71 = scmp.lt.s32.totalorder %s10, 3
      %p72 = pnand %p70, %p71
      %p73 = pneg %p72
      // Predicated region
      $region9: #{tpu_custom_call.1} parent=5 // pred_check
        _
      $region10: #{tpu_custom_call.1} parent=5 // pred_check_branch
        %75 = sbr.rel (%p72) target = $region12
      $region11: #{tpu_custom_call.1} parent=5 // pred_region
        %s76 = ssub.s32 %s10, 1
      $region12: #{tpu_custom_call.1} parent=5 // pred_fallthru
        _
      %p77 = scmp.lt.s32.totalorder %s10, 2
      // Predicated region
      $region13: #{tpu_custom_call.1} parent=5 // pred_check
        %p78 = pneg %p77
      $region14: #{tpu_custom_call.1} parent=5 // pred_check_branch
        %80 = sbr.rel (%p78) target = $region16
      $region15: #{tpu_custom_call.1} parent=5 // pred_region
        // Predicated region
        $region17: #{tpu_custom_call.1} parent=15 // pred_check
          %p81 = pneg %p30
        $region18: #{tpu_custom_call.1} parent=15 // pred_check_branch
          %83 = sbr.rel (%p81) target = $region20
        $region19: #{tpu_custom_call.1} parent=15 // pred_region
          %s84 = sand.u32 %s20, 1
          %s85 = scalar_lea.sflag [#allocation3], %s84
          %s86 = sand.u32 %s20, 1
          %s87 = smul.addr %s86, 8
          %s88 = scalar_lea.vmem [#allocation2], %s87
          %s90 = ssub.s32 128, 128
          %91 = vsyncadd %s85, %s90
          %s92 = smul.addr %s10, 2
          %s93 = smul.addr %s92, 64
          %s94 = scalar_lea.hbm %s0, %s93
          %s96 = sshll.u32 %s88, 4
          %s97 = int_to_ptr.vmem [resolvable:$true] %s96
          %99 = dma.hbm_to_vmem [thread:$0]  %s94, 128, %s97, %s85
        $region20: #{tpu_custom_call.1} parent=15 // pred_fallthru
          _
      $region16: #{tpu_custom_call.1} parent=5 // pred_fallthru
        _
      %p100 = scmp.le.s32.totalorder 1, %s10
      %p101 = scmp.lt.s32.totalorder %s10, 3
      %p102 = pnand %p100, %p101
      %p103 = pneg %p102
      // Predicated region
      $region21: #{tpu_custom_call.1} parent=5 // pred_check
        _
      $region22: #{tpu_custom_call.1} parent=5 // pred_check_branch
        %105 = sbr.rel (%p102) target = $region24
      $region23: #{tpu_custom_call.1} parent=5 // pred_region
        %s106 = ssub.s32 %s10, 1
        %s107 = sand.u32 %s23, 1
        %s108 = scalar_lea.sflag [#allocation3], %s107
        %s109 = sand.u32 %s23, 1
        %s110 = smul.addr %s109, 8
        %s111 = scalar_lea.vmem [#allocation2], %s110
        // Predicated region
        $region25: #{tpu_custom_call.1} parent=23 // pred_check
          %p112 = pneg %p36
        $region26: #{tpu_custom_call.1} parent=23 // pred_check_branch
          %114 = sbr.rel (%p112) target = $region28
        $region27: #{tpu_custom_call.1} parent=23 // pred_region
          %115 = dma.done %s108, 128
        $region28: #{tpu_custom_call.1} parent=23 // pred_fallthru
          _
        %s116 = sand.u32 %s23, 1
        %s117 = scalar_lea.sflag [#allocation3], %s116
        %s118 = sand.u32 %s23, 1
        %s119 = smul.addr %s118, 8
        %s120 = scalar_lea.vmem [#allocation2], %s119
        %p121 = pneg %p36
        %p122 = pneg %p33
        %p123 = pneg %p62
        %p124 = pneg %p59
        %p125 = scmp.lt.s32.totalorder %s15, 1
        %s126 = scalar_select %p125, %s15, 1
        %s127 = smul.addr %s126, 32
        %s128 = smul.addr %s127, 8
        %s129 = scalar_lea.vmem %s1, %s128
        %p130 = scmp.lt.s32.totalorder %s15, 1
        %s131 = scalar_select %p130, %s15, 1
        %s132 = smul.addr %s131, 32
        %s133 = smul.addr %s132, 8
        %s134 = scalar_lea.vmem %s1, %s133
        %v135 = vld [vmem:[%s111] sm:$0xff]
        %v137 = vcombine.high %v135, %v135
        %139 = vxpose.xlu0.b32.start [1/16] %v135, 128
        %140 = vxpose.xlu0.b32.cont [2/16] 0.0, 128
        %141 = vxpose.xlu0.b32.cont [3/16] 0.0, 128
        %142 = vxpose.xlu0.b32.cont [4/16] 0.0, 128
        %143 = vxpose.xlu0.b32.cont [5/16] 0.0, 128
        %144 = vxpose.xlu0.b32.cont [6/16] 0.0, 128
        %145 = vxpose.xlu0.b32.cont [7/16] 0.0, 128
        %146 = vxpose.xlu0.b32.cont [8/16] 0.0, 128
        %147 = vxpose.xlu0.b32.cont [9/16] 0.0, 128
        %148 = vxpose.xlu0.b32.cont [10/16] 0.0, 128
        %149 = vxpose.xlu0.b32.cont [11/16] 0.0, 128
        %150 = vxpose.xlu0.b32.cont [12/16] 0.0, 128
        %151 = vxpose.xlu0.b32.cont [13/16] 0.0, 128
        %152 = vxpose.xlu0.b32.cont [14/16] 0.0, 128
        %153 = vxpose.xlu0.b32.cont [15/16] 0.0, 128
        %154 = vxpose.xlu0.b32.end [16/16] 0.0, 128
        %v155 = vpop.trf.xlu0
        %v156 = vpop.trf.xlu0
        %v157 = vpop.trf.xlu0
        %v158 = vpop.trf.xlu0
        %v159 = vpop.trf.xlu0
        %v160 = vpop.trf.xlu0
        %v161 = vpop.trf.xlu0
        %v162 = vpop.trf.xlu0
        %v163 = vpop.trf.xlu0
        %v164 = vpop.trf.xlu0
        %v165 = vpop.trf.xlu0
        %v166 = vpop.trf.xlu0
        %v167 = vpop.trf.xlu0
        %v168 = vpop.trf.xlu0
        %v169 = vpop.trf.xlu0
        %v170 = vpop.trf.xlu0
        %171 = vxpose.xlu0.b32.start [1/16] %v137, 128
        %172 = vxpose.xlu0.b32.cont [2/16] 0.0, 128
        %173 = vxpose.xlu0.b32.cont [3/16] 0.0, 128
        %174 = vxpose.xlu0.b32.cont [4/16] 0.0, 128
        %175 = vxpose.xlu0.b32.cont [5/16] 0.0, 128
        %176 = vxpose.xlu0.b32.cont [6/16] 0.0, 128
        %177 = vxpose.xlu0.b32.cont [7/16] 0.0, 128
        %178 = vxpose.xlu0.b32.cont [8/16] 0.0, 128
        %179 = vxpose.xlu0.b32.cont [9/16] 0.0, 128
        %180 = vxpose.xlu0.b32.cont [10/16] 0.0, 128
        %181 = vxpose.xlu0.b32.cont [11/16] 0.0, 128
        %182 = vxpose.xlu0.b32.cont [12/16] 0.0, 128
        %183 = vxpose.xlu0.b32.cont [13/16] 0.0, 128
        %184 = vxpose.xlu0.b32.cont [14/16] 0.0, 128
        %185 = vxpose.xlu0.b32.cont [15/16] 0.0, 128
        %186 = vxpose.xlu0.b32.end [16/16] 0.0, 128
        %v187 = vpop.trf.xlu0
        %v188 = vpop.trf.xlu0
        %v189 = vpop.trf.xlu0
        %v190 = vpop.trf.xlu0
        %v191 = vpop.trf.xlu0
        %v192 = vpop.trf.xlu0
        %v193 = vpop.trf.xlu0
        %v194 = vpop.trf.xlu0
        %v195 = vpop.trf.xlu0
        %v196 = vpop.trf.xlu0
        %v197 = vpop.trf.xlu0
        %v198 = vpop.trf.xlu0
        %v199 = vpop.trf.xlu0
        %v200 = vpop.trf.xlu0
        %v201 = vpop.trf.xlu0
        %v202 = vpop.trf.xlu0
        %vm203 = vcmask 31744
        %204 = vst.msk [vmem:[%s134] sm:$0xff] %vm203, %v155
        %205 = vst.msk [vmem:[%s134 + $0x8] sm:$0xff] %vm203, %v156
        %206 = vst.msk [vmem:[%s134 + $0x10] sm:$0xff] %vm203, %v157
        %207 = vst.msk [vmem:[%s134 + $0x18] sm:$0xff] %vm203, %v158
        %208 = vst.msk [vmem:[%s134 + $0x20] sm:$0xff] %vm203, %v159
        %209 = vst.msk [vmem:[%s134 + $0x28] sm:$0xff] %vm203, %v160
        %210 = vst.msk [vmem:[%s134 + $0x30] sm:$0xff] %vm203, %v161
        %211 = vst.msk [vmem:[%s134 + $0x38] sm:$0xff] %vm203, %v162
        %212 = vst.msk [vmem:[%s134 + $0x40] sm:$0xff] %vm203, %v163
        %213 = vst.msk [vmem:[%s134 + $0x48] sm:$0xff] %vm203, %v164
        %214 = vst.msk [vmem:[%s134 + $0x50] sm:$0xff] %vm203, %v165
        %215 = vst.msk [vmem:[%s134 + $0x58] sm:$0xff] %vm203, %v166
        %216 = vst.msk [vmem:[%s134 + $0x60] sm:$0xff] %vm203, %v167
        %217 = vst.msk [vmem:[%s134 + $0x68] sm:$0xff] %vm203, %v168
        %218 = vst.msk [vmem:[%s134 + $0x70] sm:$0xff] %vm203, %v169
        %219 = vst.msk [vmem:[%s134 + $0x78] sm:$0xff] %vm203, %v170
        %220 = vst.msk [vmem:[%s134 + $0x80] sm:$0xff] %vm203, %v187
        %221 = vst.msk [vmem:[%s134 + $0x88] sm:$0xff] %vm203, %v188
        %222 = vst.msk [vmem:[%s134 + $0x90] sm:$0xff] %vm203, %v189
        %223 = vst.msk [vmem:[%s134 + $0x98] sm:$0xff] %vm203, %v190
        %224 = vst.msk [vmem:[%s134 + $0xa0] sm:$0xff] %vm203, %v191
        %225 = vst.msk [vmem:[%s134 + $0xa8] sm:$0xff] %vm203, %v192
        %226 = vst.msk [vmem:[%s134 + $0xb0] sm:$0xff] %vm203, %v193
        %227 = vst.msk [vmem:[%s134 + $0xb8] sm:$0xff] %vm203, %v194
        %228 = vst.msk [vmem:[%s134 + $0xc0] sm:$0xff] %vm203, %v195
        %229 = vst.msk [vmem:[%s134 + $0xc8] sm:$0xff] %vm203, %v196
        %230 = vst.msk [vmem:[%s134 + $0xd0] sm:$0xff] %vm203, %v197
        %231 = vst.msk [vmem:[%s134 + $0xd8] sm:$0xff] %vm203, %v198
        %232 = vst.msk [vmem:[%s134 + $0xe0] sm:$0xff] %vm203, %v199
        %233 = vst.msk [vmem:[%s134 + $0xe8] sm:$0xff] %vm203, %v200
        %234 = vst.msk [vmem:[%s134 + $0xf0] sm:$0xff] %vm203, %v201
        %235 = vst.msk [vmem:[%s134 + $0xf8] sm:$0xff] %vm203, %v202
        %p236 = scmp.lt.s32.totalorder %s15, 1
        %s237 = scalar_select %p236, %s15, 1
        %s238 = smul.addr %s237, 32
        %s239 = smul.addr %s238, 8
        %s240 = scalar_lea.vmem %s1, %s239
        // Predicated region
        $region29: #{tpu_custom_call.1} parent=23 // pred_check
          %p241 = pneg %p59
        $region30: #{tpu_custom_call.1} parent=23 // pred_check_branch
          %243 = sbr.rel (%p241) target = $region32
        $region31: #{tpu_custom_call.1} parent=23 // pred_region
          _
        $region32: #{tpu_custom_call.1} parent=23 // pred_fallthru
          _
      $region24: #{tpu_custom_call.1} parent=5 // pred_fallthru
        _
      %p244 = scmp.le.s32.totalorder 2, %s10
      // Predicated region
      $region33: #{tpu_custom_call.1} parent=5 // pred_check
        %p245 = pneg %p244
      $region34: #{tpu_custom_call.1} parent=5 // pred_check_branch
        %247 = sbr.rel (%p245) target = $region36
      $region35: #{tpu_custom_call.1} parent=5 // pred_region
        %s248 = ssub.s32 %s10, 2
        // Predicated region
        $region37: #{tpu_custom_call.1} parent=35 // pred_check
          %p249 = pneg %p65
        $region38: #{tpu_custom_call.1} parent=35 // pred_check_branch
          %251 = sbr.rel (%p249) target = $region40
        $region39: #{tpu_custom_call.1} parent=35 // pred_region
          %p252 = scmp.lt.s32.totalorder %s16, 1
          %s253 = scalar_select %p252, %s16, 1
          %s254 = smul.addr %s253, 32
          %s255 = smul.addr %s254, 8
          %s256 = scalar_lea.vmem %s1, %s255
        $region40: #{tpu_custom_call.1} parent=35 // pred_fallthru
          _
      $region36: #{tpu_custom_call.1} parent=5 // pred_fallthru
        _
    $region6: #{tpu_custom_call.1} parent=1 // loop_footer
      %s14 = sadd.s32 1, %s10
    $region7: #{tpu_custom_call.1} parent=1 // loop_footer_branch
      %9 = sbr.rel target = $region3
    $region8: #{tpu_custom_call.1} parent=1 // loop_exit
      _
    %257 = vsyncpa [#allocation3], 1
    %s258 = scalar_lea.sflag [#allocation3], 1
    %259 = vsyncpa %s258, 1

</llo_original>
